<compile_context>
chip_gen: v7x
topology: tpu7x:2x2x1
jax: 0.10.0
libtpu: 0.0.40
codegen_flags: <defaults>
</compile_context>

<pallas_src>
import jax
import jax.numpy as jnp
from jax.experimental import pallas as pl
from jax.experimental.pallas import tpu as pltpu

BN_EPS = 1e-5


def _round_up(x, m):
    return (x + m - 1) // m * m


# ---------------------------------------------------------------------------
# Kernel: one batch tile of relu(relu(relu(x@W1+b1)@W2+b2)@W3+b3).
# (BatchNorm already folded into W1/b1; Dropout is identity in eval mode.)
# Biases live in rows 0..2 of a single (8, h_p) resident array.
# ---------------------------------------------------------------------------
def subnet_kernel(x_ref, w1_ref, w2_ref, w3_ref, bias_ref, o_ref):
    cdt = w1_ref.dtype                                    # MXU input dtype (bf16)

    # x is already streamed in bf16 -> no in-kernel cast of the x tile.
    y = jnp.dot(x_ref[...], w1_ref[...], preferred_element_type=jnp.float32)
    y = jnp.maximum(y + bias_ref[0:1, :], 0.0)            # f32 epilogue

    y = jnp.dot(y.astype(cdt), w2_ref[...], preferred_element_type=jnp.float32)
    y = jnp.maximum(y + bias_ref[1:2, :], 0.0)

    y = jnp.dot(y.astype(cdt), w3_ref[...], preferred_element_type=jnp.float32)
    y = jnp.maximum(y + bias_ref[2:3, :], 0.0)

    o_ref[...] = y.astype(o_ref.dtype)


def fold_batchnorm(params):
    """Fold eval-mode BatchNorm1d into the first Linear (all in f32)."""
    scale = params["gamma"] * jax.lax.rsqrt(params["var"] + BN_EPS)    # (1, in)
    shift = params["beta"] - params["mean"] * scale                    # (1, in)
    w1 = params["w1"] * scale.reshape(-1, 1)                           # (in, h)
    b1 = params["b1"] + jnp.dot(shift, params["w1"],
                                precision=jax.lax.Precision.HIGHEST)   # (1, h)
    return w1, b1


def subnet_forward(x, params, *, block_batch=512, weight_dtype=jnp.bfloat16,
                   trim_output=True):
    """x: (batch, in_size) f32; params: dict of 2-D f32 arrays (W stored (in, out))."""
    batch, in_size = x.shape
    hidden = params["w1"].shape[1]

    # --- fold BN into the first linear, in f32 -----------------------------
    w1, b1 = fold_batchnorm(params)

    # --- pad to TPU-friendly shapes -----------------------------------------
    # hidden: 128 multiples (ideal on v5e, enough for small hidden); 256 when
    # large so the 256x256 MXU on v6e/v7x is fully fed once compute-bound.
    h_align = 128 if hidden <= 128 else 256
    h_p = _round_up(hidden, h_align)

    # batch tile: multiple of 16 (bf16 packs [16,128] per vreg); big by default.
    b_align = 16
    b_rounded = _round_up(batch, b_align)
    tb = _round_up(min(block_batch, b_rounded), b_align)
    # Guarantee >= 2 grid steps when the batch allows, so the "parallel" batch
    # axis actually shards across both TensorCores on v7x.
    if b_rounded > b_align and pl.cdiv(b_rounded, tb) < 2:
        tb = _round_up((b_rounded + 1) // 2, b_align)
    b_p = _round_up(batch, tb)
    grid = (b_p // tb,)

    def pad2(a, rows, cols):
        return jnp.pad(a, ((0, rows - a.shape[0]), (0, cols - a.shape[1])))

    # x: pad batch only (K dim left at in_size -> no 8x pad pass), stream bf16.
    x_p = jnp.pad(x, ((0, b_p - batch), (0, 0))).astype(weight_dtype)
    w1_p = pad2(w1, in_size, h_p).astype(weight_dtype)        # (in_size, h_p)
    w2_p = pad2(params["w2"], h_p, h_p).astype(weight_dtype)
    w3_p = pad2(params["w3"], h_p, h_p).astype(weight_dtype)

    # Fuse the three biases into one resident (8, h_p) f32 array (rows 0..2).
    bias = jnp.zeros((8, h_p), jnp.float32)
    bias = bias.at[0, :hidden].set(b1[0])
    bias = bias.at[1, :hidden].set(params["b2"][0])
    bias = bias.at[2, :hidden].set(params["b3"][0])

    # x/out tiled along batch (auto double-buffered); weights/bias use a
    # constant block index so they are fetched once and stay VMEM-resident.
    # (At h_p = 128 single-buffering the resident blocks via pl.Buffered(1)
    #  would save only a few KiB, so it is omitted here.)
    x_spec = pl.BlockSpec((tb, in_size), lambda i: (i, 0))
    out_spec = pl.BlockSpec((tb, h_p), lambda i: (i, 0))

    def resident(shape):
        return pl.BlockSpec(shape, lambda i: (0, 0))

    wbytes = jnp.dtype(weight_dtype).itemsize
    cost = pl.CostEstimate(
        flops=2 * b_p * (in_size * h_p + 2 * h_p * h_p),
        transcendentals=0,
        bytes_accessed=(x_p.size * wbytes
                        + (w1_p.size + w2_p.size + w3_p.size) * wbytes
                        + bias.size * 4
                        + b_p * h_p * 4),
    )

    # Real VMEM footprint (double-buffered x/out tiles, resident weights/bias,
    # in-kernel f32 intermediates) with 2x margin; capped far below the 64 MiB
    # physical per-TC VMEM on v7x.
    vmem_need = (2 * tb * in_size * wbytes
                 + 2 * tb * h_p * 4
                 + (w1_p.size + w2_p.size + w3_p.size) * wbytes
                 + bias.size * 4
                 + 4 * tb * h_p * 4)
    vmem_limit = int(min(max(2 * vmem_need, 16 * 1024 * 1024), 48 * 1024 * 1024))

    out_p = pl.pallas_call(
        subnet_kernel,
        out_shape=jax.ShapeDtypeStruct((b_p, h_p), jnp.float32),
        grid=grid,
        in_specs=[
            x_spec,
            resident((in_size, h_p)),
            resident((h_p, h_p)),
            resident((h_p, h_p)),
            resident((8, h_p)),
        ],
        out_specs=out_spec,
        compiler_params=pltpu.CompilerParams(
            dimension_semantics=("parallel",),      # megacore sharding on v7x
            vmem_limit_bytes=vmem_limit,
        ),
        cost_estimate=cost,
    )(x_p, w1_p, w2_p, w3_p, bias)

    if trim_output:
        # Note: this slice is an extra output-sized copy; downstream consumers
        # that can handle the padded (b_p, h_p) layout should pass
        # trim_output=False and use out_p directly.
        return out_p[:batch, :hidden]
    return out_p


def init_params(key, in_size, hidden_size):
    """Deterministic synthetic parameters. PyTorch Linear weight is (out, in);
    weights are stored pre-transposed as (in, out) so the kernel computes x @ W."""
    ks = jax.random.split(key, 10)

    def linear(kw, kb, fan_in, fan_out):
        bound = 1.0 / jnp.sqrt(fan_in)
        w = jax.random.uniform(kw, (fan_in, fan_out), jnp.float32, -bound, bound)
        b = jax.random.uniform(kb, (1, fan_out), jnp.float32, -bound, bound)
        return w, b

    w1, b1 = linear(ks[0], ks[1], in_size, hidden_size)
    w2, b2 = linear(ks[2], ks[3], hidden_size, hidden_size)
    w3, b3 = linear(ks[4], ks[5], hidden_size, hidden_size)

    return {
        # Non-trivial BN running stats / affine so the fold is actually exercised.
        "gamma": jax.random.uniform(ks[6], (1, in_size), jnp.float32, 0.5, 1.5),
        "beta": 0.1 * jax.random.normal(ks[7], (1, in_size), jnp.float32),
        "mean": 0.1 * jax.random.normal(ks[8], (1, in_size), jnp.float32),
        "var": jax.random.uniform(ks[9], (1, in_size), jnp.float32, 0.5, 1.5),
        "w1": w1, "b1": b1,
        "w2": w2, "b2": b2,
        "w3": w3, "b3": b3,
    }


def reference_forward(x, params, weight_dtype=jnp.bfloat16):
    """Pure-JAX reference with the SAME arithmetic as the kernel path (BN folded
    into W1/b1, matmul inputs rounded to `weight_dtype`, f32 accumulation), so
    the comparison isolates the Pallas kernel itself."""
    w1, b1 = fold_batchnorm(params)

    def q(a):  # quantize to the kernel's MXU input dtype, then compute in f32
        return a.astype(weight_dtype).astype(jnp.float32)

    hp = jax.lax.Precision.HIGHEST
    y = jnp.maximum(jnp.dot(q(x), q(w1), precision=hp) + b1, 0.0)
    y = jnp.maximum(jnp.dot(q(y), q(params["w2"]), precision=hp) + params["b2"], 0.0)
    y = jnp.maximum(jnp.dot(q(y), q(params["w3"]), precision=hp) + params["b3"], 0.0)
    return y


if __name__ == "__main__":
    batch, in_size, hidden_size = 200, 16, 32
    key = jax.random.PRNGKey(0)
    kx, kp = jax.random.split(key)

    x = jax.random.normal(kx, (batch, in_size), jnp.float32)
    params = init_params(kp, in_size, hidden_size)

    # Default block_batch=512 -> batch 200 splits into 2 grid steps of 112 rows
    # (>= 2 steps keeps both v7x TensorCores busy).
    out = subnet_forward(x, params)
    out = jax.block_until_ready(out)

    ref = reference_forward(x, params)
    assert out.shape == (batch, hidden_size)
    # bf16 rounding is replicated in the reference, so the tolerance only needs
    # to cover MXU-vs-XLA f32 accumulation-order differences.
    assert jnp.allclose(out, ref, atol=1e-2, rtol=1e-2), float(
        jnp.max(jnp.abs(out - ref)))

    print("KERNEL_OK")
</pallas_src>

<mosaic_0001>
module attributes {stable_mosaic.version = 11 : i64} {
  func.func @subnet_kernel(%arg0: i32, %arg1: memref<112x16xbf16, #tpu.memory_space<vmem>>, %arg2: memref<16x128xbf16, #tpu.memory_space<vmem>>, %arg3: memref<128x128xbf16, #tpu.memory_space<vmem>>, %arg4: memref<128x128xbf16, #tpu.memory_space<vmem>>, %arg5: memref<8x128xf32, #tpu.memory_space<vmem>>, %arg6: memref<112x128xf32, #tpu.memory_space<vmem>>) attributes {dimension_semantics = [#tpu.dimension_semantics<parallel>], iteration_bounds = array<i64: 2>, scalar_prefetch = 0 : i64, scratch_operands = 0 : i64, tpu.core_type = #tpu.core_type<tc>, window_params = [{transform_indices = @transform_0, window_bounds = array<i64: 112, 16>}, {pipeline_mode = #tpu.pipeline_mode<synchronous>, transform_indices = @transform_1, window_bounds = array<i64: 16, 128>}, {pipeline_mode = #tpu.pipeline_mode<synchronous>, transform_indices = @transform_2, window_bounds = array<i64: 128, 128>}, {pipeline_mode = #tpu.pipeline_mode<synchronous>, transform_indices = @transform_3, window_bounds = array<i64: 128, 128>}, {pipeline_mode = #tpu.pipeline_mode<synchronous>, transform_indices = @transform_4, window_bounds = array<i64: 8, 128>}, {transform_indices = @transform_5, window_bounds = array<i64: 112, 128>}]} {
    %c0 = arith.constant 0 : index
    %c0_0 = arith.constant 0 : index
    %0 = vector.load %arg1[%c0, %c0_0] : memref<112x16xbf16, #tpu.memory_space<vmem>>, vector<112x16xbf16>
    %c0_1 = arith.constant 0 : index
    %c0_2 = arith.constant 0 : index
    %1 = vector.load %arg2[%c0_1, %c0_2] : memref<16x128xbf16, #tpu.memory_space<vmem>>, vector<16x128xbf16>
    %cst = arith.constant dense<0.000000e+00> : vector<112x128xf32>
    %2 = tpu.matmul %0, %1, %cst {dimension_numbers = #tpu.dot_dimension_numbers<[1], [0], [0], [1], [0, 0, 1, 1], [], []>} : vector<112x16xbf16>, vector<16x128xbf16>, vector<112x128xf32> -> vector<112x128xf32>
    %c0_3 = arith.constant 0 : index
    %c0_4 = arith.constant 0 : index
    %3 = vector.load %arg5[%c0_3, %c0_4] : memref<8x128xf32, #tpu.memory_space<vmem>>, vector<1x128xf32>
    %4 = vector.broadcast %3 : vector<1x128xf32> to vector<112x128xf32>
    %5 = arith.addf %2, %4 : vector<112x128xf32>
    %cst_5 = arith.constant 0.000000e+00 : f32
    %6 = vector.broadcast %cst_5 : f32 to vector<112x128xf32>
    %7 = arith.maximumf %5, %6 : vector<112x128xf32>
    %8 = arith.truncf %7 : vector<112x128xf32> to vector<112x128xbf16>
    %c0_6 = arith.constant 0 : index
    %c0_7 = arith.constant 0 : index
    %9 = vector.load %arg3[%c0_6, %c0_7] : memref<128x128xbf16, #tpu.memory_space<vmem>>, vector<128x128xbf16>
    %cst_8 = arith.constant dense<0.000000e+00> : vector<112x128xf32>
    %10 = tpu.matmul %8, %9, %cst_8 {dimension_numbers = #tpu.dot_dimension_numbers<[1], [0], [0], [1], [0, 0, 1, 1], [], []>} : vector<112x128xbf16>, vector<128x128xbf16>, vector<112x128xf32> -> vector<112x128xf32>
    %c1 = arith.constant 1 : index
    %c0_9 = arith.constant 0 : index
    %11 = vector.load %arg5[%c1, %c0_9] : memref<8x128xf32, #tpu.memory_space<vmem>>, vector<1x128xf32>
    %12 = vector.broadcast %11 : vector<1x128xf32> to vector<112x128xf32>
    %13 = arith.addf %10, %12 : vector<112x128xf32>
    %cst_10 = arith.constant 0.000000e+00 : f32
    %14 = vector.broadcast %cst_10 : f32 to vector<112x128xf32>
    %15 = arith.maximumf %13, %14 : vector<112x128xf32>
    %16 = arith.truncf %15 : vector<112x128xf32> to vector<112x128xbf16>
    %c0_11 = arith.constant 0 : index
    %c0_12 = arith.constant 0 : index
    %17 = vector.load %arg4[%c0_11, %c0_12] : memref<128x128xbf16, #tpu.memory_space<vmem>>, vector<128x128xbf16>
    %cst_13 = arith.constant dense<0.000000e+00> : vector<112x128xf32>
    %18 = tpu.matmul %16, %17, %cst_13 {dimension_numbers = #tpu.dot_dimension_numbers<[1], [0], [0], [1], [0, 0, 1, 1], [], []>} : vector<112x128xbf16>, vector<128x128xbf16>, vector<112x128xf32> -> vector<112x128xf32>
    %c2 = arith.constant 2 : index
    %c0_14 = arith.constant 0 : index
    %19 = vector.load %arg5[%c2, %c0_14] : memref<8x128xf32, #tpu.memory_space<vmem>>, vector<1x128xf32>
    %20 = vector.broadcast %19 : vector<1x128xf32> to vector<112x128xf32>
    %21 = arith.addf %18, %20 : vector<112x128xf32>
    %cst_15 = arith.constant 0.000000e+00 : f32
    %22 = vector.broadcast %cst_15 : f32 to vector<112x128xf32>
    %23 = arith.maximumf %21, %22 : vector<112x128xf32>
    %c0_16 = arith.constant 0 : index
    %c0_17 = arith.constant 0 : index
    %24 = vector.load %arg6[%c0_16, %c0_17] : memref<112x128xf32, #tpu.memory_space<vmem>>, vector<112x128xf32>
    tpu.vector_store %arg6[%c0_16, %c0_17], %23 {strides = array<i32>} : memref<112x128xf32, #tpu.memory_space<vmem>>, vector<112x128xf32>,
    return
  }
  func.func @transform_0(%arg0: i32) -> (i32, i32) {
    %c0_i32 = arith.constant 0 : i32
    %c0_i32_0 = arith.constant 0 : i32
    return %arg0, %c0_i32 : i32, i32
  }
  func.func @transform_1(%arg0: i32) -> (i32, i32) {
    %c0_i32 = arith.constant 0 : i32
    %c0_i32_0 = arith.constant 0 : i32
    %c0_i32_1 = arith.constant 0 : i32
    return %c0_i32, %c0_i32_0 : i32, i32
  }
  func.func @transform_2(%arg0: i32) -> (i32, i32) {
    %c0_i32 = arith.constant 0 : i32
    %c0_i32_0 = arith.constant 0 : i32
    %c0_i32_1 = arith.constant 0 : i32
    return %c0_i32, %c0_i32_0 : i32, i32
  }
  func.func @transform_3(%arg0: i32) -> (i32, i32) {
    %c0_i32 = arith.constant 0 : i32
    %c0_i32_0 = arith.constant 0 : i32
    %c0_i32_1 = arith.constant 0 : i32
    return %c0_i32, %c0_i32_0 : i32, i32
  }
  func.func @transform_4(%arg0: i32) -> (i32, i32) {
    %c0_i32 = arith.constant 0 : i32
    %c0_i32_0 = arith.constant 0 : i32
    %c0_i32_1 = arith.constant 0 : i32
    return %c0_i32, %c0_i32_0 : i32, i32
  }
  func.func @transform_5(%arg0: i32) -> (i32, i32) {
    %c0_i32 = arith.constant 0 : i32
    %c0_i32_0 = arith.constant 0 : i32
    return %arg0, %c0_i32 : i32, i32
  }
}

</mosaic_0001>

<llo_original>
// kernel: tpu_custom_call.1
$region0: #{tpu_custom_call.1}
  #allocation0 [shape = 'u32[]', space=smem, size = 0x4, offset = 0x4, fixed_abs, tag = 'smem constant byte address 0x4 - core index']
  #allocation1 [shape = 'u32[144,128]{1,0:T(1,128)}', space=vmem, size = 0x12000, scoped, tag = 'internal scratch']
  %s0 = inlined_call_operand.vmem [shape: bf16[224,16], index: 0, kind: input, shape index: {}]
  %s1 = inlined_call_operand.hbm [shape: bf16[16,128], index: 1, kind: input, shape index: {}]
  %s2 = inlined_call_operand.vmem [shape: bf16[128,128], index: 2, kind: input, shape index: {}]
  %s3 = inlined_call_operand.vmem [shape: bf16[128,128], index: 3, kind: input, shape index: {}]
  %s4 = inlined_call_operand.vmem [shape: f32[8,128], index: 4, kind: input, shape index: {}]
  %s5 = inlined_call_operand.hbm [shape: f32[224,128], index: 5, kind: output, shape index: {}]
  %s6 = sld [smem:[#allocation0]]
  $region57: #{tpu_custom_call.1} parent=0
    _
  %s8 = ssub.s32 1, %s6
  %s9 = scalar_select 0, %s8, %s6
  $region1: #{tpu_custom_call.1} parent=0
    #allocation2 [shape = 'u8[4096]{0}', space=vmem, size = 0x1000, scoped, tag = 'input window, operand 1, single buffered']
    #allocation3 [shape = 's32[2]{0}', space=sflag, size = 0x8, scoped, tag = 'scoped memory for tpu_custom_call.1']
    #allocation4 [shape = 's32[2]{0}', space=sflag, size = 0x8, scoped, tag = 'scoped memory for tpu_custom_call.1']
    #allocation5 [shape = 'u8[114688]{0}', space=vmem, size = 0x1c000, scoped, tag = 'output window, operand 0']
    %10 = vsyncpa [#allocation3], 0
    %11 = vsyncpa [#allocation4], 0
    %s12 = scalar_lea.sflag [#allocation4], 1
    %13 = vsyncpa %s12, 0
    loop: start=0, step=1, limit=4
    $region2: #{tpu_custom_call.1} parent=1 // loop_pre_header
      _
    $region3: #{tpu_custom_call.1} parent=1 // loop_header
      %s15 = sphi 0, %s19
      %p16 = scmp.ge.s32.totalorder %s15, 4
      %s25 = sphi 0, %s27
      %s28 = sphi 0, %s25
      %s29 = sphi 0, %s28
      %s45 = sphi 0, %s29
      %s49 = sphi 0, %s49
      %s51 = sphi 0, %s49
      %s52 = sphi 0, %s51
      %s66 = sphi 0, %s52
      %s70 = sphi 0, %s70
      %s72 = sphi 0, %s70
      %s73 = sphi 0, %s72
      %s87 = sphi 0, %s73
      %s91 = sphi 0, %s91
      %s93 = sphi 0, %s91
      %s94 = sphi 0, %s93
      %s108 = sphi 0, %s94
      %s112 = sphi 0, %s112
      %s114 = sphi 0, %s112
      %s115 = sphi 0, %s114
      %s129 = sphi 0, %s115
      %s135 = sphi 0, %s137
      %s138 = sphi 0, %s135
      %s139 = sphi 0, %s138
      %s155 = sphi 0, %s139
    $region4: #{tpu_custom_call.1} parent=1 // loop_header_branch
      %18 = sbr.rel (%p16) target = $region8
    $region5: #{tpu_custom_call.1} parent=1 // loop_body
      %s20 = ssub.s32 %s15, 1
      %s21 = ssub.s32 %s15, 2
      %s22 = sadd.s32 %s15, 1
      %s23 = ssub.s32 %s15, %s22
      %p24 = scmp.eq.s32.totalorder %s23, 0
      %s26 = sadd.s32 %s25, 1
      %s27 = scalar_select %p24, %s25, %s26
      %p30 = pneg %p24
      %p31 = scmp.eq.s32.totalorder %s15, 1
      %p32 = por %p30, %p31
      %p33 = scmp.ne.s32.totalorder %s25, %s28
      %p34 = scmp.eq.s32.totalorder %s15, 0
      %p35 = por %p33, %p34
      %p36 = scmp.ne.s32.totalorder %s25, %s28
      %p37 = scmp.eq.s32.totalorder %s20, 1
      %p38 = por %p36, %p37
      %p39 = scmp.ne.s32.totalorder %s28, %s29
      %p40 = scmp.eq.s32.totalorder %s20, 0
      %p41 = por %p39, %p40
      %p42 = scmp.ne.s32.totalorder %s28, %s29
      %p43 = scmp.eq.s32.totalorder %s21, 1
      %p44 = por %p42, %p43
      %p46 = scmp.ne.s32.totalorder %s29, %s45
      %p47 = scmp.eq.s32.totalorder %s21, 0
      %p48 = por %p46, %p47
      %s50 = sadd.s32 %s49, 1
      %p53 = scmp.eq.s32.totalorder %s15, 1
      %p54 = scmp.ne.s32.totalorder %s49, %s51
      %p55 = scmp.eq.s32.totalorder %s15, 0
      %p56 = por %p54, %p55
      %p57 = scmp.ne.s32.totalorder %s49, %s51
      %p58 = scmp.eq.s32.totalorder %s20, 1
      %p59 = por %p57, %p58
      %p60 = scmp.ne.s32.totalorder %s51, %s52
      %p61 = scmp.eq.s32.totalorder %s20, 0
      %p62 = por %p60, %p61
      %p63 = scmp.ne.s32.totalorder %s51, %s52
      %p64 = scmp.eq.s32.totalorder %s21, 1
      %p65 = por %p63, %p64
      %p67 = scmp.ne.s32.totalorder %s52, %s66
      %p68 = scmp.eq.s32.totalorder %s21, 0
      %p69 = por %p67, %p68
      %s71 = sadd.s32 %s70, 1
      %p74 = scmp.eq.s32.totalorder %s15, 1
      %p75 = scmp.ne.s32.totalorder %s70, %s72
      %p76 = scmp.eq.s32.totalorder %s15, 0
      %p77 = por %p75, %p76
      %p78 = scmp.ne.s32.totalorder %s70, %s72
      %p79 = scmp.eq.s32.totalorder %s20, 1
      %p80 = por %p78, %p79
      %p81 = scmp.ne.s32.totalorder %s72, %s73
      %p82 = scmp.eq.s32.totalorder %s20, 0
      %p83 = por %p81, %p82
      %p84 = scmp.ne.s32.totalorder %s72, %s73
      %p85 = scmp.eq.s32.totalorder %s21, 1
      %p86 = por %p84, %p85
      %p88 = scmp.ne.s32.totalorder %s73, %s87
      %p89 = scmp.eq.s32.totalorder %s21, 0
      %p90 = por %p88, %p89
      %s92 = sadd.s32 %s91, 1
      %p95 = scmp.eq.s32.totalorder %s15, 1
      %p96 = scmp.ne.s32.totalorder %s91, %s93
      %p97 = scmp.eq.s32.totalorder %s15, 0
      %p98 = por %p96, %p97
      %p99 = scmp.ne.s32.totalorder %s91, %s93
      %p100 = scmp.eq.s32.totalorder %s20, 1
      %p101 = por %p99, %p100
      %p102 = scmp.ne.s32.totalorder %s93, %s94
      %p103 = scmp.eq.s32.totalorder %s20, 0
      %p104 = por %p102, %p103
      %p105 = scmp.ne.s32.totalorder %s93, %s94
      %p106 = scmp.eq.s32.totalorder %s21, 1
      %p107 = por %p105, %p106
      %p109 = scmp.ne.s32.totalorder %s94, %s108
      %p110 = scmp.eq.s32.totalorder %s21, 0
      %p111 = por %p109, %p110
      %s113 = sadd.s32 %s112, 1
      %p116 = scmp.eq.s32.totalorder %s15, 1
      %p117 = scmp.ne.s32.totalorder %s112, %s114
      %p118 = scmp.eq.s32.totalorder %s15, 0
      %p119 = por %p117, %p118
      %p120 = scmp.ne.s32.totalorder %s112, %s114
      %p121 = scmp.eq.s32.totalorder %s20, 1
      %p122 = por %p120, %p121
      %p123 = scmp.ne.s32.totalorder %s114, %s115
      %p124 = scmp.eq.s32.totalorder %s20, 0
      %p125 = por %p123, %p124
      %p126 = scmp.ne.s32.totalorder %s114, %s115
      %p127 = scmp.eq.s32.totalorder %s21, 1
      %p128 = por %p126, %p127
      %p130 = scmp.ne.s32.totalorder %s115, %s129
      %p131 = scmp.eq.s32.totalorder %s21, 0
      %p132 = por %p130, %p131
      %s133 = ssub.s32 %s15, %s22
      %p134 = scmp.eq.s32.totalorder %s133, 0
      %s136 = sadd.s32 %s135, 1
      %s137 = scalar_select %p134, %s135, %s136
      %p140 = pneg %p134
      %p141 = scmp.eq.s32.totalorder %s15, 1
      %p142 = por %p140, %p141
      %p143 = scmp.ne.s32.totalorder %s135, %s138
      %p144 = scmp.eq.s32.totalorder %s15, 0
      %p145 = por %p143, %p144
      %p146 = scmp.ne.s32.totalorder %s135, %s138
      %p147 = scmp.eq.s32.totalorder %s20, 1
      %p148 = por %p146, %p147
      %p149 = scmp.ne.s32.totalorder %s138, %s139
      %p150 = scmp.eq.s32.totalorder %s20, 0
      %p151 = por %p149, %p150
      %p152 = scmp.ne.s32.totalorder %s138, %s139
      %p153 = scmp.eq.s32.totalorder %s21, 1
      %p154 = por %p152, %p153
      %p156 = scmp.ne.s32.totalorder %s139, %s155
      %p157 = scmp.eq.s32.totalorder %s21, 0
      %p158 = por %p156, %p157
      %p159 = scmp.le.s32.totalorder 1, %s15
      %p160 = scmp.lt.s32.totalorder %s15, 3
      %p161 = pnand %p159, %p160
      %p162 = pneg %p161
      // Predicated region
      $region9: #{tpu_custom_call.1} parent=5 // pred_check
        _
      $region10: #{tpu_custom_call.1} parent=5 // pred_check_branch
        %164 = sbr.rel (%p161) target = $region12
      $region11: #{tpu_custom_call.1} parent=5 // pred_region
        %s165 = ssub.s32 %s15, 1
        // Predicated region
        $region13: #{tpu_custom_call.1} parent=11 // pred_check
          %p166 = pneg %p62
        $region14: #{tpu_custom_call.1} parent=11 // pred_check_branch
          %168 = sbr.rel (%p166) target = $region16
        $region15: #{tpu_custom_call.1} parent=11 // pred_region
          %s170 = ssub.s32 128, 128
          %171 = vsyncadd [#allocation3], %s170
          %s172 = sshll.u32 [#allocation2], 4
          %s173 = int_to_ptr.vmem [resolvable:$true] %s172
          %178 = dma.hbm_to_vmem [thread:$0]  %s1, 128, %s173, [#allocation3], 64, 64, 4
        $region16: #{tpu_custom_call.1} parent=11 // pred_fallthru
          _
        // Predicated region
        $region17: #{tpu_custom_call.1} parent=11 // pred_check
          %p179 = pneg %p83
        $region18: #{tpu_custom_call.1} parent=11 // pred_check_branch
          %181 = sbr.rel (%p179) target = $region20
        $region19: #{tpu_custom_call.1} parent=11 // pred_region
          _
        $region20: #{tpu_custom_call.1} parent=11 // pred_fallthru
          _
        // Predicated region
        $region21: #{tpu_custom_call.1} parent=11 // pred_check
          %p182 = pneg %p104
        $region22: #{tpu_custom_call.1} parent=11 // pred_check_branch
          %184 = sbr.rel (%p182) target = $region24
        $region23: #{tpu_custom_call.1} parent=11 // pred_region
          _
        $region24: #{tpu_custom_call.1} parent=11 // pred_fallthru
          _
        // Predicated region
        $region25: #{tpu_custom_call.1} parent=11 // pred_check
          %p185 = pneg %p125
        $region26: #{tpu_custom_call.1} parent=11 // pred_check_branch
          %187 = sbr.rel (%p185) target = $region28
        $region27: #{tpu_custom_call.1} parent=11 // pred_region
          _
        $region28: #{tpu_custom_call.1} parent=11 // pred_fallthru
          _
      $region12: #{tpu_custom_call.1} parent=5 // pred_fallthru
        _
      %p188 = scmp.lt.s32.totalorder %s15, 2
      // Predicated region
      $region29: #{tpu_custom_call.1} parent=5 // pred_check
        %p189 = pneg %p188
      $region30: #{tpu_custom_call.1} parent=5 // pred_check_branch
        %191 = sbr.rel (%p189) target = $region32
      $region31: #{tpu_custom_call.1} parent=5 // pred_region
        // Predicated region
        $region33: #{tpu_custom_call.1} parent=31 // pred_check
          %p192 = pneg %p35
        $region34: #{tpu_custom_call.1} parent=31 // pred_check_branch
          %194 = sbr.rel (%p192) target = $region36
        $region35: #{tpu_custom_call.1} parent=31 // pred_region
          %s195 = smul.u32 14, %s15
          %p196 = scmp.lt.s32.totalorder %s195, 27
          %s197 = scalar_select %p196, %s195, 27
          %s198 = smul.addr %s197, 4
          %s199 = scalar_lea.vmem %s0, %s198
          %s200 = smul.u32 14, %s15
        $region36: #{tpu_custom_call.1} parent=31 // pred_fallthru
          _
      $region32: #{tpu_custom_call.1} parent=5 // pred_fallthru
        _
      %p201 = scmp.le.s32.totalorder 1, %s15
      %p202 = scmp.lt.s32.totalorder %s15, 3
      %p203 = pnand %p201, %p202
      %p204 = pneg %p203
      // Predicated region
      $region37: #{tpu_custom_call.1} parent=5 // pred_check
        _
      $region38: #{tpu_custom_call.1} parent=5 // pred_check_branch
        %206 = sbr.rel (%p203) target = $region40
      $region39: #{tpu_custom_call.1} parent=5 // pred_region
        %s207 = ssub.s32 %s15, 1
        // Predicated region
        $region41: #{tpu_custom_call.1} parent=39 // pred_check
          %p208 = pneg %p62
        $region42: #{tpu_custom_call.1} parent=39 // pred_check_branch
          %210 = sbr.rel (%p208) target = $region44
        $region43: #{tpu_custom_call.1} parent=39 // pred_region
          %211 = dma.done [#allocation3], 128
        $region44: #{tpu_custom_call.1} parent=39 // pred_fallthru
          _
        %s212 = smul.u32 14, %s20
        %p213 = scmp.lt.s32.totalorder %s212, 27
        %s214 = scalar_select %p213, %s212, 27
        %s215 = smul.addr %s214, 4
        %s216 = scalar_lea.vmem %s0, %s215
        %p217 = pneg %p41
        %p218 = pneg %p38
        %p219 = pneg %p62
        %p220 = pneg %p59
        %p221 = pneg %p83
        %p222 = pneg %p80
        %p223 = pneg %p104
        %p224 = pneg %p101
        %p225 = pneg %p125
        %p226 = pneg %p122
        %p227 = pneg %p151
        %p228 = pneg %p148
        %s229 = sand.u32 %s138, 1
        %s230 = scalar_lea.sflag [#allocation4], %s229
        %s231 = sand.u32 %s138, 1
        %s232 = smul.addr %s231, 112
        %s233 = scalar_lea.vmem [#allocation5], %s232
        %s234 = smul.u32 14, %s20
        %p235 = scmp.lt.s32.totalorder %s234, 27
        %s236 = scalar_select %p235, %s234, 27
        %s237 = smul.addr %s236, 4
        %s238 = scalar_lea.vmem %s0, %s237
        %s239 = smul.u32 14, %s20
        %s240 = smul.u32 14, %s20
        %v242 = vld [vmem:[%s238] sm:$0xf]
        %v243 = vld [vmem:[%s238 + $0x4] sm:$0xf]
        %v244 = vld [vmem:[%s238 + $0x8] sm:$0xf]
        %v245 = vld [vmem:[%s238 + $0xc] sm:$0xf]
        %v246 = vld [vmem:[%s238 + $0x10] sm:$0xf]
        %v247 = vld [vmem:[%s238 + $0x14] sm:$0xf]
        %v248 = vld [vmem:[%s238 + $0x18] sm:$0xf]
        %v249 = vld [vmem:[%s238 + $0x1c] sm:$0xf]
        %v250 = vld [vmem:[%s238 + $0x20] sm:$0xf]
        %v251 = vld [vmem:[%s238 + $0x24] sm:$0xf]
        %v252 = vld [vmem:[%s238 + $0x28] sm:$0xf]
        %v253 = vld [vmem:[%s238 + $0x2c] sm:$0xf]
        %v254 = vld [vmem:[%s238 + $0x30] sm:$0xf]
        %v255 = vld [vmem:[%s238 + $0x34] sm:$0xf]
        %v256 = vld [vmem:[#allocation2] sm:$0xf]
        %v257 = vld [vmem:[#allocation2 + $0x4] sm:$0xf]
        %v258 = vld [vmem:[%s4] sm:$0x1]
        %v259 = vlaneseq
        %v260 = vshrl.u32 %v259, 7
        %v261 = vsub.s32 0, %v260
        %v262 = vrot.slane %v258, %v261
        %v277 = vunpack.c.l.b16 %v242
        %v278 = vunpack.c.l.b16 %v243
        %v279 = vunpack.c.l.b16 %v244
        %v280 = vunpack.c.l.b16 %v245
        %v281 = vunpack.c.l.b16 %v246
        %v282 = vunpack.c.l.b16 %v247
        %v283 = vunpack.c.l.b16 %v248
        %v284 = vunpack.c.l.b16 %v249
        %v285 = vunpack.c.l.b16 %v250
        %v286 = vunpack.c.l.b16 %v251
        %v287 = vunpack.c.l.b16 %v252
        %v288 = vunpack.c.l.b16 %v253
        %v289 = vunpack.c.l.b16 %v254
        %v290 = vunpack.c.l.b16 %v255
        %v291 = vpack.c.b16 %v278, %v277
        %v292 = vpack.c.b16 %v280, %v279
        %v293 = vpack.c.b16 %v282, %v281
        %v294 = vpack.c.b16 %v284, %v283
        %v295 = vpack.c.b16 %v286, %v285
        %v296 = vpack.c.b16 %v288, %v287
        %v297 = vpack.c.b16 %v290, %v289
        %v300 = vunpack.c.l.b16 %v256
        %v301 = vunpack.c.l.b16 %v257
        %v302 = vpack.c.b16 %v301, %v300
        %vm304 = vcmask 130048
        %v306 = vsel %vm304, %v291, 0
        %v309 = vsel %vm304, %v292, 0
        %v312 = vsel %vm304, %v293, 0
        %v315 = vsel %vm304, %v294, 0
        %v318 = vsel %vm304, %v295, 0
        %v321 = vsel %vm304, %v296, 0
        %v324 = vsel %vm304, %v297, 0
        %326 = vmatprep.subr.bf16.mxu0 0
        %327 = vmatpush1.bf16.msra.mxu0 %v302
        %328 = vmatprep.subr.bf16.mxu0 0
        %329 = vmatpush1.bf16.msra.mxu0 0
        %330 = vmatprep.subr.bf16.mxu0 0
        %331 = vmatpush1.bf16.msra.mxu0 0
        %332 = vmatprep.subr.bf16.mxu0 0
        %333 = vmatpush1.bf16.msra.mxu0 0
        %334 = vmatprep.subr.bf16.mxu0 0
        %335 = vmatpush1.bf16.msra.mxu0 0
        %336 = vmatprep.subr.bf16.mxu0 0
        %337 = vmatpush1.bf16.msra.mxu0 0
        %338 = vmatprep.subr.bf16.mxu0 0
        %339 = vmatpush1.bf16.msra.mxu0 0
        %340 = vmatprep.subr.bf16.mxu0 0
        %341 = vmatpush1.bf16.msra.mxu0 0
        %342 = vmatprep.subr.bf16.mxu0 0
        %343 = vmatpush1.bf16.msra.mxu0 0
        %344 = vmatprep.subr.bf16.mxu0 0
        %345 = vmatpush1.bf16.msra.mxu0 0
        %346 = vmatprep.subr.bf16.mxu0 0
        %347 = vmatpush1.bf16.msra.mxu0 0
        %348 = vmatprep.subr.bf16.mxu0 0
        %349 = vmatpush1.bf16.msra.mxu0 0
        %350 = vmatprep.subr.bf16.mxu0 0
        %351 = vmatpush1.bf16.msra.mxu0 0
        %352 = vmatprep.subr.bf16.mxu0 0
        %353 = vmatpush1.bf16.msra.mxu0 0
        %354 = vmatprep.subr.bf16.mxu0 0
        %355 = vmatpush1.bf16.msra.mxu0 0
        %356 = vmatprep.subr.bf16.mxu0 0
        %357 = vmatpush1.bf16.msra.mxu0 0
        %358 = vmatprep.mubr.bf16.mxu0 0
        %359 = vmatmul.mubr.bf16.gmra.mrb[0].mxu0 %v306
        %v360 = vpop.f32.mrb[0].mxu0
        %v361 = vadd.f32 %v262, %v360
        %v362 = vpop.f32.mrb[0].mxu0
        %v363 = vpop.f32.mrb[0].mxu0
        %v364 = vadd.f32 %v262, %v363
        %v365 = vpop.f32.mrb[0].mxu0
        %366 = vmatprep.mubr.bf16.mxu0 0
        %367 = vmatmul.mubr.bf16.gmra.mrb[0].mxu0 %v309
        %v368 = vpop.f32.mrb[0].mxu0
        %v369 = vadd.f32 %v262, %v368
        %v370 = vpop.f32.mrb[0].mxu0
        %v371 = vpop.f32.mrb[0].mxu0
        %v372 = vadd.f32 %v262, %v371
        %v373 = vpop.f32.mrb[0].mxu0
        %374 = vmatprep.mubr.bf16.mxu0 0
        %375 = vmatmul.mubr.bf16.gmra.mrb[0].mxu0 %v312
        %v376 = vpop.f32.mrb[0].mxu0
        %v377 = vadd.f32 %v262, %v376
        %v378 = vpop.f32.mrb[0].mxu0
        %v379 = vpop.f32.mrb[0].mxu0
        %v380 = vadd.f32 %v262, %v379
        %v381 = vpop.f32.mrb[0].mxu0
        %382 = vmatprep.mubr.bf16.mxu0 0
        %383 = vmatmul.mubr.bf16.gmra.mrb[0].mxu0 %v315
        %v384 = vpop.f32.mrb[0].mxu0
        %v385 = vadd.f32 %v262, %v384
        %v386 = vpop.f32.mrb[0].mxu0
        %v387 = vpop.f32.mrb[0].mxu0
        %v388 = vadd.f32 %v262, %v387
        %v389 = vpop.f32.mrb[0].mxu0
        %390 = vmatprep.mubr.bf16.mxu0 0
        %391 = vmatmul.mubr.bf16.gmra.mrb[0].mxu0 %v318
        %v392 = vpop.f32.mrb[0].mxu0
        %v393 = vadd.f32 %v262, %v392
        %v394 = vpop.f32.mrb[0].mxu0
        %v395 = vpop.f32.mrb[0].mxu0
        %v396 = vadd.f32 %v262, %v395
        %v397 = vpop.f32.mrb[0].mxu0
        %398 = vmatprep.mubr.bf16.mxu0 0
        %399 = vmatmul.mubr.bf16.gmra.mrb[0].mxu0 %v321
        %v400 = vpop.f32.mrb[0].mxu0
        %v401 = vadd.f32 %v262, %v400
        %v402 = vpop.f32.mrb[0].mxu0
        %v403 = vpop.f32.mrb[0].mxu0
        %v404 = vadd.f32 %v262, %v403
        %v405 = vpop.f32.mrb[0].mxu0
        %406 = vmatprep.mubr.bf16.mxu0 0
        %407 = vmatmul.mubr.bf16.gmra.mrb[0].mxu0 %v324
        %v408 = vpop.f32.mrb[0].mxu0
        %v409 = vadd.f32 %v262, %v408
        %v410 = vpop.f32.mrb[0].mxu0
        %v411 = vpop.f32.mrb[0].mxu0
        %v412 = vadd.f32 %v262, %v411
        %v413 = vpop.f32.mrb[0].mxu0
        %414 = vdwg.mxu0
        %v415 = vmax.f32 %v361, 0.0
        %v416 = vmax.f32 %v364, 0.0
        %v417 = vmax.f32 %v369, 0.0
        %v418 = vmax.f32 %v372, 0.0
        %v419 = vmax.f32 %v377, 0.0
        %v420 = vmax.f32 %v380, 0.0
        %v421 = vmax.f32 %v385, 0.0
        %v422 = vmax.f32 %v388, 0.0
        %v423 = vmax.f32 %v393, 0.0
        %v424 = vmax.f32 %v396, 0.0
        %v425 = vmax.f32 %v401, 0.0
        %v426 = vmax.f32 %v404, 0.0
        %v427 = vmax.f32 %v409, 0.0
        %v428 = vmax.f32 %v412, 0.0
        %v429 = vpack.c.bf16 %v416, %v415
        %v430 = vpack.c.bf16 %v418, %v417
        %v431 = vpack.c.bf16 %v420, %v419
        %v432 = vpack.c.bf16 %v422, %v421
        %v433 = vpack.c.bf16 %v424, %v423
        %v434 = vpack.c.bf16 %v426, %v425
        %v435 = vpack.c.bf16 %v428, %v427
        %v436 = vld [vmem:[%s2] sm:$0xf]
        %v437 = vld [vmem:[%s2 + $0x4] sm:$0xf]
        %v438 = vld [vmem:[%s2 + $0x8] sm:$0xf]
        %v439 = vld [vmem:[%s2 + $0xc] sm:$0xf]
        %v440 = vld [vmem:[%s2 + $0x10] sm:$0xf]
        %v441 = vld [vmem:[%s2 + $0x14] sm:$0xf]
        %v442 = vld [vmem:[%s2 + $0x18] sm:$0xf]
        %v443 = vld [vmem:[%s2 + $0x1c] sm:$0xf]
        %v444 = vld [vmem:[%s2 + $0x20] sm:$0xf]
        %v445 = vld [vmem:[%s2 + $0x24] sm:$0xf]
        %v446 = vld [vmem:[%s2 + $0x28] sm:$0xf]
        %v447 = vld [vmem:[%s2 + $0x2c] sm:$0xf]
        %v448 = vld [vmem:[%s2 + $0x30] sm:$0xf]
        %v449 = vld [vmem:[%s2 + $0x34] sm:$0xf]
        %v450 = vld [vmem:[%s2 + $0x38] sm:$0xf]
        %v451 = vld [vmem:[%s2 + $0x3c] sm:$0xf]
        %v452 = vld [vmem:[%s4 + $0x1] sm:$0x1]
        %v453 = vlaneseq
        %v454 = vshrl.u32 %v453, 7
        %v455 = vsub.s32 0, %v454
        %v456 = vrot.slane %v452, %v455
        %v473 = vunpack.c.l.b16 %v436
        %v474 = vunpack.c.l.b16 %v437
        %v475 = vunpack.c.l.b16 %v438
        %v476 = vunpack.c.l.b16 %v439
        %v477 = vunpack.c.l.b16 %v440
        %v478 = vunpack.c.l.b16 %v441
        %v479 = vunpack.c.l.b16 %v442
        %v480 = vunpack.c.l.b16 %v443
        %v481 = vunpack.c.l.b16 %v444
        %v482 = vunpack.c.l.b16 %v445
        %v483 = vunpack.c.l.b16 %v446
        %v484 = vunpack.c.l.b16 %v447
        %v485 = vunpack.c.l.b16 %v448
        %v486 = vunpack.c.l.b16 %v449
        %v487 = vunpack.c.l.b16 %v450
        %v488 = vunpack.c.l.b16 %v451
        %v489 = vpack.c.b16 %v474, %v473
        %v490 = vpack.c.b16 %v476, %v475
        %v491 = vpack.c.b16 %v478, %v477
        %v492 = vpack.c.b16 %v480, %v479
        %v493 = vpack.c.b16 %v482, %v481
        %v494 = vpack.c.b16 %v484, %v483
        %v495 = vpack.c.b16 %v486, %v485
        %v496 = vpack.c.b16 %v488, %v487
        %505 = vmatprep.subr.bf16.mxu0 0
        %506 = vmatpush1.bf16.msra.mxu0 %v489
        %507 = vmatprep.subr.bf16.mxu0 0
        %508 = vmatpush1.bf16.msra.mxu0 %v490
        %509 = vmatprep.subr.bf16.mxu0 0
        %510 = vmatpush1.bf16.msra.mxu0 %v491
        %511 = vmatprep.subr.bf16.mxu0 0
        %512 = vmatpush1.bf16.msra.mxu0 %v492
        %513 = vmatprep.subr.bf16.mxu0 0
        %514 = vmatpush1.bf16.msra.mxu0 %v493
        %515 = vmatprep.subr.bf16.mxu0 0
        %516 = vmatpush1.bf16.msra.mxu0 %v494
        %517 = vmatprep.subr.bf16.mxu0 0
        %518 = vmatpush1.bf16.msra.mxu0 %v495
        %519 = vmatprep.subr.bf16.mxu0 0
        %520 = vmatpush1.bf16.msra.mxu0 %v496
        %521 = vmatprep.subr.bf16.mxu0 0
        %522 = vmatpush1.bf16.msra.mxu0 0
        %523 = vmatprep.subr.bf16.mxu0 0
        %524 = vmatpush1.bf16.msra.mxu0 0
        %525 = vmatprep.subr.bf16.mxu0 0
        %526 = vmatpush1.bf16.msra.mxu0 0
        %527 = vmatprep.subr.bf16.mxu0 0
        %528 = vmatpush1.bf16.msra.mxu0 0
        %529 = vmatprep.subr.bf16.mxu0 0
        %530 = vmatpush1.bf16.msra.mxu0 0
        %531 = vmatprep.subr.bf16.mxu0 0
        %532 = vmatpush1.bf16.msra.mxu0 0
        %533 = vmatprep.subr.bf16.mxu0 0
        %534 = vmatpush1.bf16.msra.mxu0 0
        %535 = vmatprep.subr.bf16.mxu0 0
        %536 = vmatpush1.bf16.msra.mxu0 0
        %537 = vmatprep.mubr.bf16.mxu0 0
        %538 = vmatmul.mubr.bf16.gmra.mrb[0].mxu0 %v429
        %v539 = vpop.f32.mrb[0].mxu0
        %v540 = vadd.f32 %v456, %v539
        %v541 = vpop.f32.mrb[0].mxu0
        %v542 = vpop.f32.mrb[0].mxu0
        %v543 = vadd.f32 %v456, %v542
        %v544 = vpop.f32.mrb[0].mxu0
        %545 = vmatprep.mubr.bf16.mxu0 0
        %546 = vmatmul.mubr.bf16.gmra.mrb[0].mxu0 %v430
        %v547 = vpop.f32.mrb[0].mxu0
        %v548 = vadd.f32 %v456, %v547
        %v549 = vpop.f32.mrb[0].mxu0
        %v550 = vpop.f32.mrb[0].mxu0
        %v551 = vadd.f32 %v456, %v550
        %v552 = vpop.f32.mrb[0].mxu0
        %553 = vmatprep.mubr.bf16.mxu0 0
        %554 = vmatmul.mubr.bf16.gmra.mrb[0].mxu0 %v431
        %v555 = vpop.f32.mrb[0].mxu0
        %v556 = vadd.f32 %v456, %v555
        %v557 = vpop.f32.mrb[0].mxu0
        %v558 = vpop.f32.mrb[0].mxu0
        %v559 = vadd.f32 %v456, %v558
        %v560 = vpop.f32.mrb[0].mxu0
        %561 = vmatprep.mubr.bf16.mxu0 0
        %562 = vmatmul.mubr.bf16.gmra.mrb[0].mxu0 %v432
        %v563 = vpop.f32.mrb[0].mxu0
        %v564 = vadd.f32 %v456, %v563
        %v565 = vpop.f32.mrb[0].mxu0
        %v566 = vpop.f32.mrb[0].mxu0
        %v567 = vadd.f32 %v456, %v566
        %v568 = vpop.f32.mrb[0].mxu0
        %569 = vmatprep.mubr.bf16.mxu0 0
        %570 = vmatmul.mubr.bf16.gmra.mrb[0].mxu0 %v433
        %v571 = vpop.f32.mrb[0].mxu0
        %v572 = vadd.f32 %v456, %v571
        %v573 = vpop.f32.mrb[0].mxu0
        %v574 = vpop.f32.mrb[0].mxu0
        %v575 = vadd.f32 %v456, %v574
        %v576 = vpop.f32.mrb[0].mxu0
        %577 = vmatprep.mubr.bf16.mxu0 0
        %578 = vmatmul.mubr.bf16.gmra.mrb[0].mxu0 %v434
        %v579 = vpop.f32.mrb[0].mxu0
        %v580 = vadd.f32 %v456, %v579
        %v581 = vpop.f32.mrb[0].mxu0
        %v582 = vpop.f32.mrb[0].mxu0
        %v583 = vadd.f32 %v456, %v582
        %v584 = vpop.f32.mrb[0].mxu0
        %585 = vmatprep.mubr.bf16.mxu0 0
        %586 = vmatmul.mubr.bf16.gmra.mrb[0].mxu0 %v435
        %v587 = vpop.f32.mrb[0].mxu0
        %v588 = vadd.f32 %v456, %v587
        %v589 = vpop.f32.mrb[0].mxu0
        %v590 = vpop.f32.mrb[0].mxu0
        %v591 = vadd.f32 %v456, %v590
        %v592 = vpop.f32.mrb[0].mxu0
        %593 = vdwg.mxu0
        %v594 = vmax.f32 %v540, 0.0
        %v595 = vmax.f32 %v543, 0.0
        %v596 = vmax.f32 %v548, 0.0
        %v597 = vmax.f32 %v551, 0.0
        %v598 = vmax.f32 %v556, 0.0
        %v599 = vmax.f32 %v559, 0.0
        %v600 = vmax.f32 %v564, 0.0
        %v601 = vmax.f32 %v567, 0.0
        %v602 = vmax.f32 %v572, 0.0
        %v603 = vmax.f32 %v575, 0.0
        %v604 = vmax.f32 %v580, 0.0
        %v605 = vmax.f32 %v583, 0.0
        %v606 = vmax.f32 %v588, 0.0
        %v607 = vmax.f32 %v591, 0.0
        %v608 = vpack.c.bf16 %v595, %v594
        %v609 = vpack.c.bf16 %v597, %v596
        %v610 = vpack.c.bf16 %v599, %v598
        %v611 = vpack.c.bf16 %v601, %v600
        %v612 = vpack.c.bf16 %v603, %v602
        %v613 = vpack.c.bf16 %v605, %v604
        %v614 = vpack.c.bf16 %v607, %v606
        %v615 = vld [vmem:[%s3] sm:$0xf]
        %v616 = vld [vmem:[%s3 + $0x4] sm:$0xf]
        %v617 = vld [vmem:[%s3 + $0x8] sm:$0xf]
        %v618 = vld [vmem:[%s3 + $0xc] sm:$0xf]
        %v619 = vld [vmem:[%s3 + $0x10] sm:$0xf]
        %v620 = vld [vmem:[%s3 + $0x14] sm:$0xf]
        %v621 = vld [vmem:[%s3 + $0x18] sm:$0xf]
        %v622 = vld [vmem:[%s3 + $0x1c] sm:$0xf]
        %v623 = vld [vmem:[%s3 + $0x20] sm:$0xf]
        %v624 = vld [vmem:[%s3 + $0x24] sm:$0xf]
        %v625 = vld [vmem:[%s3 + $0x28] sm:$0xf]
        %v626 = vld [vmem:[%s3 + $0x2c] sm:$0xf]
        %v627 = vld [vmem:[%s3 + $0x30] sm:$0xf]
        %v628 = vld [vmem:[%s3 + $0x34] sm:$0xf]
        %v629 = vld [vmem:[%s3 + $0x38] sm:$0xf]
        %v630 = vld [vmem:[%s3 + $0x3c] sm:$0xf]
        %v631 = vld [vmem:[%s4 + $0x2] sm:$0x1]
        %v632 = vlaneseq
        %v633 = vshrl.u32 %v632, 7
        %v634 = vsub.s32 0, %v633
        %v635 = vrot.slane %v631, %v634
        %v652 = vunpack.c.l.b16 %v615
        %v653 = vunpack.c.l.b16 %v616
        %v654 = vunpack.c.l.b16 %v617
        %v655 = vunpack.c.l.b16 %v618
        %v656 = vunpack.c.l.b16 %v619
        %v657 = vunpack.c.l.b16 %v620
        %v658 = vunpack.c.l.b16 %v621
        %v659 = vunpack.c.l.b16 %v622
        %v660 = vunpack.c.l.b16 %v623
        %v661 = vunpack.c.l.b16 %v624
        %v662 = vunpack.c.l.b16 %v625
        %v663 = vunpack.c.l.b16 %v626
        %v664 = vunpack.c.l.b16 %v627
        %v665 = vunpack.c.l.b16 %v628
        %v666 = vunpack.c.l.b16 %v629
        %v667 = vunpack.c.l.b16 %v630
        %v668 = vpack.c.b16 %v653, %v652
        %v669 = vpack.c.b16 %v655, %v654
        %v670 = vpack.c.b16 %v657, %v656
        %v671 = vpack.c.b16 %v659, %v658
        %v672 = vpack.c.b16 %v661, %v660
        %v673 = vpack.c.b16 %v663, %v662
        %v674 = vpack.c.b16 %v665, %v664
        %v675 = vpack.c.b16 %v667, %v666
        %684 = vmatprep.subr.bf16.mxu0 0
        %685 = vmatpush1.bf16.msra.mxu0 %v668
        %686 = vmatprep.subr.bf16.mxu0 0
        %687 = vmatpush1.bf16.msra.mxu0 %v669
        %688 = vmatprep.subr.bf16.mxu0 0
        %689 = vmatpush1.bf16.msra.mxu0 %v670
        %690 = vmatprep.subr.bf16.mxu0 0
        %691 = vmatpush1.bf16.msra.mxu0 %v671
        %692 = vmatprep.subr.bf16.mxu0 0
        %693 = vmatpush1.bf16.msra.mxu0 %v672
        %694 = vmatprep.subr.bf16.mxu0 0
        %695 = vmatpush1.bf16.msra.mxu0 %v673
        %696 = vmatprep.subr.bf16.mxu0 0
        %697 = vmatpush1.bf16.msra.mxu0 %v674
        %698 = vmatprep.subr.bf16.mxu0 0
        %699 = vmatpush1.bf16.msra.mxu0 %v675
        %700 = vmatprep.subr.bf16.mxu0 0
        %701 = vmatpush1.bf16.msra.mxu0 0
        %702 = vmatprep.subr.bf16.mxu0 0
        %703 = vmatpush1.bf16.msra.mxu0 0
        %704 = vmatprep.subr.bf16.mxu0 0
        %705 = vmatpush1.bf16.msra.mxu0 0
        %706 = vmatprep.subr.bf16.mxu0 0
        %707 = vmatpush1.bf16.msra.mxu0 0
        %708 = vmatprep.subr.bf16.mxu0 0
        %709 = vmatpush1.bf16.msra.mxu0 0
        %710 = vmatprep.subr.bf16.mxu0 0
        %711 = vmatpush1.bf16.msra.mxu0 0
        %712 = vmatprep.subr.bf16.mxu0 0
        %713 = vmatpush1.bf16.msra.mxu0 0
        %714 = vmatprep.subr.bf16.mxu0 0
        %715 = vmatpush1.bf16.msra.mxu0 0
        %716 = vmatprep.mubr.bf16.mxu0 0
        %717 = vmatmul.mubr.bf16.gmra.mrb[0].mxu0 %v608
        %v718 = vpop.f32.mrb[0].mxu0
        %v719 = vadd.f32 %v635, %v718
        %v720 = vpop.f32.mrb[0].mxu0
        %v721 = vpop.f32.mrb[0].mxu0
        %v722 = vadd.f32 %v635, %v721
        %v723 = vpop.f32.mrb[0].mxu0
        %724 = vmatprep.mubr.bf16.mxu0 0
        %725 = vmatmul.mubr.bf16.gmra.mrb[0].mxu0 %v609
        %v726 = vpop.f32.mrb[0].mxu0
        %v727 = vadd.f32 %v635, %v726
        %v728 = vpop.f32.mrb[0].mxu0
        %v729 = vpop.f32.mrb[0].mxu0
        %v730 = vadd.f32 %v635, %v729
        %v731 = vpop.f32.mrb[0].mxu0
        %732 = vmatprep.mubr.bf16.mxu0 0
        %733 = vmatmul.mubr.bf16.gmra.mrb[0].mxu0 %v610
        %v734 = vpop.f32.mrb[0].mxu0
        %v735 = vadd.f32 %v635, %v734
        %v736 = vpop.f32.mrb[0].mxu0
        %v737 = vpop.f32.mrb[0].mxu0
        %v738 = vadd.f32 %v635, %v737
        %v739 = vpop.f32.mrb[0].mxu0
        %740 = vmatprep.mubr.bf16.mxu0 0
        %741 = vmatmul.mubr.bf16.gmra.mrb[0].mxu0 %v611
        %v742 = vpop.f32.mrb[0].mxu0
        %v743 = vadd.f32 %v635, %v742
        %v744 = vpop.f32.mrb[0].mxu0
        %v745 = vpop.f32.mrb[0].mxu0
        %v746 = vadd.f32 %v635, %v745
        %v747 = vpop.f32.mrb[0].mxu0
        %748 = vmatprep.mubr.bf16.mxu0 0
        %749 = vmatmul.mubr.bf16.gmra.mrb[0].mxu0 %v612
        %v750 = vpop.f32.mrb[0].mxu0
        %v751 = vadd.f32 %v635, %v750
        %v752 = vpop.f32.mrb[0].mxu0
        %v753 = vpop.f32.mrb[0].mxu0
        %v754 = vadd.f32 %v635, %v753
        %v755 = vpop.f32.mrb[0].mxu0
        %756 = vmatprep.mubr.bf16.mxu0 0
        %757 = vmatmul.mubr.bf16.gmra.mrb[0].mxu0 %v613
        %v758 = vpop.f32.mrb[0].mxu0
        %v759 = vadd.f32 %v635, %v758
        %v760 = vpop.f32.mrb[0].mxu0
        %v761 = vpop.f32.mrb[0].mxu0
        %v762 = vadd.f32 %v635, %v761
        %v763 = vpop.f32.mrb[0].mxu0
        %764 = vmatprep.mubr.bf16.mxu0 0
        %765 = vmatmul.mubr.bf16.gmra.mrb[0].mxu0 %v614
        %v766 = vpop.f32.mrb[0].mxu0
        %v767 = vadd.f32 %v635, %v766
        %v768 = vpop.f32.mrb[0].mxu0
        %v769 = vpop.f32.mrb[0].mxu0
        %v770 = vadd.f32 %v635, %v769
        %v771 = vpop.f32.mrb[0].mxu0
        %772 = vdwg.mxu0
        %v773 = vmax.f32 %v719, 0.0
        %v774 = vmax.f32 %v722, 0.0
        %v775 = vmax.f32 %v727, 0.0
        %v776 = vmax.f32 %v730, 0.0
        %v777 = vmax.f32 %v735, 0.0
        %v778 = vmax.f32 %v738, 0.0
        %v779 = vmax.f32 %v743, 0.0
        %v780 = vmax.f32 %v746, 0.0
        %v781 = vmax.f32 %v751, 0.0
        %v782 = vmax.f32 %v754, 0.0
        %v783 = vmax.f32 %v759, 0.0
        %v784 = vmax.f32 %v762, 0.0
        %v785 = vmax.f32 %v767, 0.0
        %v786 = vmax.f32 %v770, 0.0
        %787 = vst [vmem:[%s233] sm:$0xff] %v773
        %788 = vst [vmem:[%s233 + $0x8] sm:$0xff] %v774
        %789 = vst [vmem:[%s233 + $0x10] sm:$0xff] %v775
        %790 = vst [vmem:[%s233 + $0x18] sm:$0xff] %v776
        %791 = vst [vmem:[%s233 + $0x20] sm:$0xff] %v777
        %792 = vst [vmem:[%s233 + $0x28] sm:$0xff] %v778
        %793 = vst [vmem:[%s233 + $0x30] sm:$0xff] %v779
        %794 = vst [vmem:[%s233 + $0x38] sm:$0xff] %v780
        %795 = vst [vmem:[%s233 + $0x40] sm:$0xff] %v781
        %796 = vst [vmem:[%s233 + $0x48] sm:$0xff] %v782
        %797 = vst [vmem:[%s233 + $0x50] sm:$0xff] %v783
        %798 = vst [vmem:[%s233 + $0x58] sm:$0xff] %v784
        %799 = vst [vmem:[%s233 + $0x60] sm:$0xff] %v785
        %800 = vst [vmem:[%s233 + $0x68] sm:$0xff] %v786
        %s801 = sand.u32 %s138, 1
        %s802 = scalar_lea.sflag [#allocation4], %s801
        %s803 = sand.u32 %s138, 1
        %s804 = smul.addr %s803, 112
        %s805 = scalar_lea.vmem [#allocation5], %s804
        // Predicated region
        $region45: #{tpu_custom_call.1} parent=39 // pred_check
          %p806 = pneg %p148
        $region46: #{tpu_custom_call.1} parent=39 // pred_check_branch
          %808 = sbr.rel (%p806) target = $region48
        $region47: #{tpu_custom_call.1} parent=39 // pred_region
          %s809 = smul.u32 14, %s20
          %s811 = ssub.s32 1792, 1792
          %812 = vsyncadd %s802, %s811
          %s813 = smul.addr %s809, 128
          %s814 = scalar_lea.hbm %s5, %s813
          %s815 = sshll.u32 %s805, 4
          %s816 = int_to_ptr.vmem [resolvable:$true] %s815
          %821 = dma.vmem_to_hbm [thread:$0]  %s816, 1792, %s814, %s802, 128, 128, 8
        $region48: #{tpu_custom_call.1} parent=39 // pred_fallthru
          _
      $region40: #{tpu_custom_call.1} parent=5 // pred_fallthru
        _
      %p822 = scmp.le.s32.totalorder 2, %s15
      // Predicated region
      $region49: #{tpu_custom_call.1} parent=5 // pred_check
        %p823 = pneg %p822
      $region50: #{tpu_custom_call.1} parent=5 // pred_check_branch
        %825 = sbr.rel (%p823) target = $region52
      $region51: #{tpu_custom_call.1} parent=5 // pred_region
        %s826 = ssub.s32 %s15, 2
        // Predicated region
        $region53: #{tpu_custom_call.1} parent=51 // pred_check
          %p827 = pneg %p154
        $region54: #{tpu_custom_call.1} parent=51 // pred_check_branch
          %829 = sbr.rel (%p827) target = $region56
        $region55: #{tpu_custom_call.1} parent=51 // pred_region
          %s830 = sand.u32 %s139, 1
          %s831 = scalar_lea.sflag [#allocation4], %s830
          %s832 = sand.u32 %s139, 1
          %s833 = smul.addr %s832, 112
          %s834 = scalar_lea.vmem [#allocation5], %s833
          %835 = dma.done %s831, 1792
        $region56: #{tpu_custom_call.1} parent=51 // pred_fallthru
          _
      $region52: #{tpu_custom_call.1} parent=5 // pred_fallthru
        _
    $region6: #{tpu_custom_call.1} parent=1 // loop_footer
      %s19 = sadd.s32 1, %s15
    $region7: #{tpu_custom_call.1} parent=1 // loop_footer_branch
      %14 = sbr.rel target = $region3
    $region8: #{tpu_custom_call.1} parent=1 // loop_exit
      _
    %836 = vsyncpa [#allocation3], 1
    %s837 = scalar_lea.sflag [#allocation3], 1
    %838 = vsyncpa %s837, 1
    %839 = vsyncpa [#allocation4], 1
    %s840 = scalar_lea.sflag [#allocation4], 1
    %841 = vsyncpa %s840, 1

</llo_original>
